<compile_context>
chip_gen: v7x
topology: tpu7x:2x2x1
jax: 0.10.0
libtpu: 0.0.40
codegen_flags: <defaults>
</compile_context>

<pallas_src>
import jax
import jax.numpy as jnp
from jax.experimental import pallas as pl
from jax.experimental.pallas import tpu as pltpu

EPS = 1e-6


def _round_up(n, m):
    return ((n + m - 1) // m) * m


def sublayer_connection_kernel(x_ref, gamma_ref, beta_ref, w_ref, b_ref, o_ref):
    # x_ref: (TILE_M, D) tile of the flattened [B*S, D] input.
    x = x_ref[...].astype(jnp.float32)

    # --- LayerNorm over d_model (stats in f32), eps = 1e-6 ---
    mean = jnp.mean(x, axis=-1, keepdims=True)
    centered = x - mean
    var = jnp.mean(centered * centered, axis=-1, keepdims=True)
    x_hat = centered * jax.lax.rsqrt(var + EPS)
    h = x_hat * gamma_ref[...].astype(jnp.float32) + beta_ref[...].astype(jnp.float32)

    # --- sublayer: Linear(d_model, d_model) on the MXU ---
    # Operands in the weight's stored dtype (bf16 by default: no f32 upcast of
    # the resident weight), f32 accumulation.
    y = jnp.dot(h.astype(w_ref.dtype), w_ref[...],
                preferred_element_type=jnp.float32)
    y = y + b_ref[...].astype(jnp.float32)

    # --- dropout (eval mode: identity) + residual add ---
    o_ref[...] = (x + y).astype(o_ref.dtype)


def _auto_tile_m(n_rows, d, x_bytes, w_bytes, budget_bytes=24 * 1024 * 1024):
    """Largest multiple-of-8 row tile whose double-buffered footprint fits a
    conservative VMEM budget (safe for v7x's smaller VMEM / default scoped limit)."""
    resident = d * d * w_bytes + 3 * d * 4          # weight + gamma/beta/bias
    tile = 512
    while tile > 8:
        per_tile = 2 * 2 * tile * d * x_bytes       # (in + out) x double buffer
        if resident + per_tile <= budget_bytes:
            break
        tile //= 2
    return min(tile, max(8, _round_up(n_rows, 8)))


def sublayer_connection(x, gamma, beta, w, b, *, matmul_dtype=jnp.bfloat16,
                        tile_m=None):
    """out = x + dropout_eval(Linear(LayerNorm(x)));  x: [B, S, D]."""
    B, S, D = x.shape
    N = B * S
    x2 = x.reshape(N, D)
    w_c = w.astype(matmul_dtype)          # resident weight in MXU dtype
    gamma2 = gamma.reshape(1, D)
    beta2 = beta.reshape(1, D)
    b2 = b.reshape(1, D)

    x_bytes = x.dtype.itemsize
    w_bytes = w_c.dtype.itemsize
    if tile_m is None:
        tile_m = _auto_tile_m(N, D, x_bytes, w_bytes)
    tile_m = max(8, _round_up(tile_m, 8))

    n_pad = _round_up(N, tile_m)
    if n_pad != N:
        x2 = jnp.pad(x2, ((0, n_pad - N), (0, 0)))
    grid = (n_pad // tile_m,)

    cost = pl.CostEstimate(
        flops=2 * N * D * D + 10 * N * D,
        transcendentals=N,
        bytes_accessed=2 * N * D * x_bytes + D * D * w_bytes + 3 * D * 4,
    )

    out = pl.pallas_call(
        sublayer_connection_kernel,
        out_shape=jax.ShapeDtypeStruct((n_pad, D), x.dtype),
        grid=grid,
        in_specs=[
            pl.BlockSpec((tile_m, D), lambda i: (i, 0)),   # x: row-tiled
            pl.BlockSpec((1, D), lambda i: (0, 0)),        # gamma (resident)
            pl.BlockSpec((1, D), lambda i: (0, 0)),        # beta  (resident)
            pl.BlockSpec((D, D), lambda i: (0, 0)),        # w     (resident)
            pl.BlockSpec((1, D), lambda i: (0, 0)),        # bias  (resident)
        ],
        out_specs=pl.BlockSpec((tile_m, D), lambda i: (i, 0)),
        compiler_params=pltpu.CompilerParams(
            dimension_semantics=("parallel",)),
        cost_estimate=cost,
    )(x2, gamma2, beta2, w_c, b2)

    return out[:N].reshape(B, S, D)


def reference(x, gamma, beta, w, b, matmul_dtype=jnp.bfloat16):
    xf = x.astype(jnp.float32)
    mean = jnp.mean(xf, axis=-1, keepdims=True)
    var = jnp.mean((xf - mean) ** 2, axis=-1, keepdims=True)
    h = (xf - mean) * jax.lax.rsqrt(var + EPS) * gamma + beta
    y = jnp.dot(h.astype(matmul_dtype), w.astype(matmul_dtype),
                preferred_element_type=jnp.float32) + b
    return (xf + y).astype(x.dtype)


if __name__ == "__main__":
    B, S, D = 2, 8, 128   # small shapes; D lane-dense (multiple of 128)

    key = jax.random.PRNGKey(0)
    kx, kw, kb = jax.random.split(key, 3)

    x = jax.random.normal(kx, (B, S, D), dtype=jnp.float32)
    # LayerNorm defaults: weight = 1, bias = 0
    gamma = jnp.ones((D,), dtype=jnp.float32)
    beta = jnp.zeros((D,), dtype=jnp.float32)
    # Sublayer Linear(d_model, d_model) params
    w = jax.random.normal(kw, (D, D), dtype=jnp.float32) * (1.0 / jnp.sqrt(D))
    b = jax.random.normal(kb, (D,), dtype=jnp.float32) * 0.01

    # 1) exact f32 matmul path, multi-step grid (tile_m=8 -> grid=(2,))
    out_f32 = jax.block_until_ready(
        sublayer_connection(x, gamma, beta, w, b,
                            matmul_dtype=jnp.float32, tile_m=8))
    ref_f32 = reference(x, gamma, beta, w, b, matmul_dtype=jnp.float32)
    assert out_f32.shape == (B, S, D)
    assert jnp.allclose(out_f32, ref_f32, atol=1e-4, rtol=1e-4), \
        float(jnp.max(jnp.abs(out_f32 - ref_f32)))

    # 2) default bf16-MXU path with auto tiling (f32 accumulation)
    out_bf16 = jax.block_until_ready(sublayer_connection(x, gamma, beta, w, b))
    ref_bf16 = reference(x, gamma, beta, w, b, matmul_dtype=jnp.bfloat16)
    assert out_bf16.shape == (B, S, D)
    assert jnp.allclose(out_bf16, ref_bf16, atol=5e-3, rtol=5e-3), \
        float(jnp.max(jnp.abs(out_bf16 - ref_bf16)))

    print("KERNEL_OK")
</pallas_src>

<mosaic_0001>
module attributes {stable_mosaic.version = 11 : i64} {
  func.func @sublayer_connection_kernel(%arg0: i32, %arg1: memref<8x128xf32, #tpu.memory_space<vmem>>, %arg2: memref<1x128xf32, #tpu.memory_space<vmem>>, %arg3: memref<1x128xf32, #tpu.memory_space<vmem>>, %arg4: memref<128x128xf32, #tpu.memory_space<vmem>>, %arg5: memref<1x128xf32, #tpu.memory_space<vmem>>, %arg6: memref<8x128xf32, #tpu.memory_space<vmem>>) attributes {dimension_semantics = [#tpu.dimension_semantics<parallel>], iteration_bounds = array<i64: 2>, scalar_prefetch = 0 : i64, scratch_operands = 0 : i64, tpu.core_type = #tpu.core_type<tc>, window_params = [{transform_indices = @transform_0, window_bounds = array<i64: 8, 128>}, {pipeline_mode = #tpu.pipeline_mode<synchronous>, transform_indices = @transform_1, window_bounds = array<i64: 1, 128>}, {pipeline_mode = #tpu.pipeline_mode<synchronous>, transform_indices = @transform_2, window_bounds = array<i64: 1, 128>}, {pipeline_mode = #tpu.pipeline_mode<synchronous>, transform_indices = @transform_3, window_bounds = array<i64: 128, 128>}, {pipeline_mode = #tpu.pipeline_mode<synchronous>, transform_indices = @transform_4, window_bounds = array<i64: 1, 128>}, {transform_indices = @transform_5, window_bounds = array<i64: 8, 128>}]} {
    %c0 = arith.constant 0 : index
    %c0_0 = arith.constant 0 : index
    %0 = vector.load %arg1[%c0, %c0_0] : memref<8x128xf32, #tpu.memory_space<vmem>>, vector<8x128xf32>
    %cst = arith.constant dense<0.000000e+00> : vector<8xf32>
    %1 = vector.multi_reduction <add>, %0, %cst [1] : vector<8x128xf32> to vector<8xf32>
    %2 = vector.shape_cast %1 : vector<8xf32> to vector<8x1xf32>
    %cst_1 = arith.constant 1.280000e+02 : f32
    %3 = vector.broadcast %cst_1 : f32 to vector<8x1xf32>
    %4 = arith.divf %2, %3 : vector<8x1xf32>
    %5 = vector.broadcast %4 : vector<8x1xf32> to vector<8x128xf32>
    %6 = arith.subf %0, %5 : vector<8x128xf32>
    %7 = arith.mulf %6, %6 : vector<8x128xf32>
    %cst_2 = arith.constant dense<0.000000e+00> : vector<8xf32>
    %8 = vector.multi_reduction <add>, %7, %cst_2 [1] : vector<8x128xf32> to vector<8xf32>
    %9 = vector.shape_cast %8 : vector<8xf32> to vector<8x1xf32>
    %cst_3 = arith.constant 1.280000e+02 : f32
    %10 = vector.broadcast %cst_3 : f32 to vector<8x1xf32>
    %11 = arith.divf %9, %10 : vector<8x1xf32>
    %cst_4 = arith.constant 9.99999997E-7 : f32
    %12 = vector.broadcast %cst_4 : f32 to vector<8x1xf32>
    %13 = arith.addf %11, %12 : vector<8x1xf32>
    %14 = math.rsqrt %13 : vector<8x1xf32>
    %15 = vector.broadcast %14 : vector<8x1xf32> to vector<8x128xf32>
    %16 = arith.mulf %6, %15 : vector<8x128xf32>
    %c0_5 = arith.constant 0 : index
    %c0_6 = arith.constant 0 : index
    %17 = vector.load %arg2[%c0_5, %c0_6] : memref<1x128xf32, #tpu.memory_space<vmem>>, vector<1x128xf32>
    %18 = vector.broadcast %17 : vector<1x128xf32> to vector<8x128xf32>
    %19 = arith.mulf %16, %18 : vector<8x128xf32>
    %c0_7 = arith.constant 0 : index
    %c0_8 = arith.constant 0 : index
    %20 = vector.load %arg3[%c0_7, %c0_8] : memref<1x128xf32, #tpu.memory_space<vmem>>, vector<1x128xf32>
    %21 = vector.broadcast %20 : vector<1x128xf32> to vector<8x128xf32>
    %22 = arith.addf %19, %21 : vector<8x128xf32>
    %c0_9 = arith.constant 0 : index
    %c0_10 = arith.constant 0 : index
    %23 = vector.load %arg4[%c0_9, %c0_10] : memref<128x128xf32, #tpu.memory_space<vmem>>, vector<128x128xf32>
    %cst_11 = arith.constant dense<0.000000e+00> : vector<8x128xf32>
    %24 = tpu.matmul %22, %23, %cst_11 {dimension_numbers = #tpu.dot_dimension_numbers<[1], [0], [0], [1], [0, 0, 1, 1], [], []>} : vector<8x128xf32>, vector<128x128xf32>, vector<8x128xf32> -> vector<8x128xf32>
    %c0_12 = arith.constant 0 : index
    %c0_13 = arith.constant 0 : index
    %25 = vector.load %arg5[%c0_12, %c0_13] : memref<1x128xf32, #tpu.memory_space<vmem>>, vector<1x128xf32>
    %26 = vector.broadcast %25 : vector<1x128xf32> to vector<8x128xf32>
    %27 = arith.addf %24, %26 : vector<8x128xf32>
    %28 = arith.addf %0, %27 : vector<8x128xf32>
    %c0_14 = arith.constant 0 : index
    %c0_15 = arith.constant 0 : index
    %29 = vector.load %arg6[%c0_14, %c0_15] : memref<8x128xf32, #tpu.memory_space<vmem>>, vector<8x128xf32>
    tpu.vector_store %arg6[%c0_14, %c0_15], %28 {strides = array<i32>} : memref<8x128xf32, #tpu.memory_space<vmem>>, vector<8x128xf32>,
    return
  }
  func.func @transform_0(%arg0: i32) -> (i32, i32) {
    %c0_i32 = arith.constant 0 : i32
    %c0_i32_0 = arith.constant 0 : i32
    return %arg0, %c0_i32 : i32, i32
  }
  func.func @transform_1(%arg0: i32) -> (i32, i32) {
    %c0_i32 = arith.constant 0 : i32
    %c0_i32_0 = arith.constant 0 : i32
    %c0_i32_1 = arith.constant 0 : i32
    return %c0_i32, %c0_i32_0 : i32, i32
  }
  func.func @transform_2(%arg0: i32) -> (i32, i32) {
    %c0_i32 = arith.constant 0 : i32
    %c0_i32_0 = arith.constant 0 : i32
    %c0_i32_1 = arith.constant 0 : i32
    return %c0_i32, %c0_i32_0 : i32, i32
  }
  func.func @transform_3(%arg0: i32) -> (i32, i32) {
    %c0_i32 = arith.constant 0 : i32
    %c0_i32_0 = arith.constant 0 : i32
    %c0_i32_1 = arith.constant 0 : i32
    return %c0_i32, %c0_i32_0 : i32, i32
  }
  func.func @transform_4(%arg0: i32) -> (i32, i32) {
    %c0_i32 = arith.constant 0 : i32
    %c0_i32_0 = arith.constant 0 : i32
    %c0_i32_1 = arith.constant 0 : i32
    return %c0_i32, %c0_i32_0 : i32, i32
  }
  func.func @transform_5(%arg0: i32) -> (i32, i32) {
    %c0_i32 = arith.constant 0 : i32
    %c0_i32_0 = arith.constant 0 : i32
    return %arg0, %c0_i32 : i32, i32
  }
}

</mosaic_0001>

<llo_original>
// kernel: tpu_custom_call.1
$region0: #{tpu_custom_call.1}
  #allocation0 [shape = 'u32[]', space=smem, size = 0x4, offset = 0x4, fixed_abs, tag = 'smem constant byte address 0x4 - core index']
  #allocation1 [shape = 'u32[144,128]{1,0:T(1,128)}', space=vmem, size = 0x12000, scoped, tag = 'internal scratch']
  %s0 = inlined_call_operand.hbm [shape: f32[16,128], index: 0, kind: input, shape index: {}]
  %s1 = inlined_call_operand.vmem [shape: f32[1,128], index: 1, kind: input, shape index: {}]
  %s2 = inlined_call_operand.vmem [shape: f32[1,128], index: 2, kind: input, shape index: {}]
  %s3 = inlined_call_operand.hbm [shape: f32[128,128], index: 3, kind: input, shape index: {}]
  %s4 = inlined_call_operand.vmem [shape: f32[1,128], index: 4, kind: input, shape index: {}]
  %s5 = inlined_call_operand.hbm [shape: f32[16,128], index: 5, kind: output, shape index: {}]
  %s6 = sld [smem:[#allocation0]]
  $region61: #{tpu_custom_call.1} parent=0
    _
  %s8 = ssub.s32 1, %s6
  %s9 = scalar_select 0, %s8, %s6
  $region1: #{tpu_custom_call.1} parent=0
    #allocation2 [shape = 'u8[8192]{0}', space=vmem, size = 0x2000, scoped, tag = 'input window, operand 0']
    #allocation3 [shape = 's32[2]{0}', space=sflag, size = 0x8, scoped, tag = 'scoped memory for tpu_custom_call.1']
    #allocation4 [shape = 's32[2]{0}', space=sflag, size = 0x8, scoped, tag = 'scoped memory for tpu_custom_call.1']
    #allocation5 [shape = 'u8[65536]{0}', space=vmem, size = 0x10000, scoped, tag = 'input window, operand 3, single buffered']
    #allocation6 [shape = 's32[1]{0}', space=sflag, size = 0x4, scoped, tag = 'scoped memory for tpu_custom_call.1']
    #allocation7 [shape = 'u8[8192]{0}', space=vmem, size = 0x2000, scoped, tag = 'output window, operand 0']
    %10 = vsyncpa [#allocation3], 0
    %s11 = scalar_lea.sflag [#allocation3], 1
    %12 = vsyncpa %s11, 0
    %13 = vsyncpa [#allocation6], 0
    %14 = vsyncpa [#allocation4], 0
    %s15 = scalar_lea.sflag [#allocation4], 1
    %16 = vsyncpa %s15, 0
    loop: start=0, step=1, limit=4
    $region2: #{tpu_custom_call.1} parent=1 // loop_pre_header
      _
    $region3: #{tpu_custom_call.1} parent=1 // loop_header
      %s18 = sphi 0, %s22
      %p19 = scmp.ge.s32.totalorder %s18, 4
      %s28 = sphi 0, %s30
      %s31 = sphi 0, %s28
      %s32 = sphi 0, %s31
      %s48 = sphi 0, %s32
      %s52 = sphi 0, %s52
      %s54 = sphi 0, %s52
      %s55 = sphi 0, %s54
      %s69 = sphi 0, %s55
      %s73 = sphi 0, %s73
      %s75 = sphi 0, %s73
      %s76 = sphi 0, %s75
      %s90 = sphi 0, %s76
      %s94 = sphi 0, %s94
      %s96 = sphi 0, %s94
      %s97 = sphi 0, %s96
      %s111 = sphi 0, %s97
      %s115 = sphi 0, %s115
      %s117 = sphi 0, %s115
      %s118 = sphi 0, %s117
      %s132 = sphi 0, %s118
      %s138 = sphi 0, %s140
      %s141 = sphi 0, %s138
      %s142 = sphi 0, %s141
      %s158 = sphi 0, %s142
    $region4: #{tpu_custom_call.1} parent=1 // loop_header_branch
      %21 = sbr.rel (%p19) target = $region8
    $region5: #{tpu_custom_call.1} parent=1 // loop_body
      %s23 = ssub.s32 %s18, 1
      %s24 = ssub.s32 %s18, 2
      %s25 = sadd.s32 %s18, 1
      %s26 = ssub.s32 %s18, %s25
      %p27 = scmp.eq.s32.totalorder %s26, 0
      %s29 = sadd.s32 %s28, 1
      %s30 = scalar_select %p27, %s28, %s29
      %p33 = pneg %p27
      %p34 = scmp.eq.s32.totalorder %s18, 1
      %p35 = por %p33, %p34
      %p36 = scmp.ne.s32.totalorder %s28, %s31
      %p37 = scmp.eq.s32.totalorder %s18, 0
      %p38 = por %p36, %p37
      %p39 = scmp.ne.s32.totalorder %s28, %s31
      %p40 = scmp.eq.s32.totalorder %s23, 1
      %p41 = por %p39, %p40
      %p42 = scmp.ne.s32.totalorder %s31, %s32
      %p43 = scmp.eq.s32.totalorder %s23, 0
      %p44 = por %p42, %p43
      %p45 = scmp.ne.s32.totalorder %s31, %s32
      %p46 = scmp.eq.s32.totalorder %s24, 1
      %p47 = por %p45, %p46
      %p49 = scmp.ne.s32.totalorder %s32, %s48
      %p50 = scmp.eq.s32.totalorder %s24, 0
      %p51 = por %p49, %p50
      %s53 = sadd.s32 %s52, 1
      %p56 = scmp.eq.s32.totalorder %s18, 1
      %p57 = scmp.ne.s32.totalorder %s52, %s54
      %p58 = scmp.eq.s32.totalorder %s18, 0
      %p59 = por %p57, %p58
      %p60 = scmp.ne.s32.totalorder %s52, %s54
      %p61 = scmp.eq.s32.totalorder %s23, 1
      %p62 = por %p60, %p61
      %p63 = scmp.ne.s32.totalorder %s54, %s55
      %p64 = scmp.eq.s32.totalorder %s23, 0
      %p65 = por %p63, %p64
      %p66 = scmp.ne.s32.totalorder %s54, %s55
      %p67 = scmp.eq.s32.totalorder %s24, 1
      %p68 = por %p66, %p67
      %p70 = scmp.ne.s32.totalorder %s55, %s69
      %p71 = scmp.eq.s32.totalorder %s24, 0
      %p72 = por %p70, %p71
      %s74 = sadd.s32 %s73, 1
      %p77 = scmp.eq.s32.totalorder %s18, 1
      %p78 = scmp.ne.s32.totalorder %s73, %s75
      %p79 = scmp.eq.s32.totalorder %s18, 0
      %p80 = por %p78, %p79
      %p81 = scmp.ne.s32.totalorder %s73, %s75
      %p82 = scmp.eq.s32.totalorder %s23, 1
      %p83 = por %p81, %p82
      %p84 = scmp.ne.s32.totalorder %s75, %s76
      %p85 = scmp.eq.s32.totalorder %s23, 0
      %p86 = por %p84, %p85
      %p87 = scmp.ne.s32.totalorder %s75, %s76
      %p88 = scmp.eq.s32.totalorder %s24, 1
      %p89 = por %p87, %p88
      %p91 = scmp.ne.s32.totalorder %s76, %s90
      %p92 = scmp.eq.s32.totalorder %s24, 0
      %p93 = por %p91, %p92
      %s95 = sadd.s32 %s94, 1
      %p98 = scmp.eq.s32.totalorder %s18, 1
      %p99 = scmp.ne.s32.totalorder %s94, %s96
      %p100 = scmp.eq.s32.totalorder %s18, 0
      %p101 = por %p99, %p100
      %p102 = scmp.ne.s32.totalorder %s94, %s96
      %p103 = scmp.eq.s32.totalorder %s23, 1
      %p104 = por %p102, %p103
      %p105 = scmp.ne.s32.totalorder %s96, %s97
      %p106 = scmp.eq.s32.totalorder %s23, 0
      %p107 = por %p105, %p106
      %p108 = scmp.ne.s32.totalorder %s96, %s97
      %p109 = scmp.eq.s32.totalorder %s24, 1
      %p110 = por %p108, %p109
      %p112 = scmp.ne.s32.totalorder %s97, %s111
      %p113 = scmp.eq.s32.totalorder %s24, 0
      %p114 = por %p112, %p113
      %s116 = sadd.s32 %s115, 1
      %p119 = scmp.eq.s32.totalorder %s18, 1
      %p120 = scmp.ne.s32.totalorder %s115, %s117
      %p121 = scmp.eq.s32.totalorder %s18, 0
      %p122 = por %p120, %p121
      %p123 = scmp.ne.s32.totalorder %s115, %s117
      %p124 = scmp.eq.s32.totalorder %s23, 1
      %p125 = por %p123, %p124
      %p126 = scmp.ne.s32.totalorder %s117, %s118
      %p127 = scmp.eq.s32.totalorder %s23, 0
      %p128 = por %p126, %p127
      %p129 = scmp.ne.s32.totalorder %s117, %s118
      %p130 = scmp.eq.s32.totalorder %s24, 1
      %p131 = por %p129, %p130
      %p133 = scmp.ne.s32.totalorder %s118, %s132
      %p134 = scmp.eq.s32.totalorder %s24, 0
      %p135 = por %p133, %p134
      %s136 = ssub.s32 %s18, %s25
      %p137 = scmp.eq.s32.totalorder %s136, 0
      %s139 = sadd.s32 %s138, 1
      %s140 = scalar_select %p137, %s138, %s139
      %p143 = pneg %p137
      %p144 = scmp.eq.s32.totalorder %s18, 1
      %p145 = por %p143, %p144
      %p146 = scmp.ne.s32.totalorder %s138, %s141
      %p147 = scmp.eq.s32.totalorder %s18, 0
      %p148 = por %p146, %p147
      %p149 = scmp.ne.s32.totalorder %s138, %s141
      %p150 = scmp.eq.s32.totalorder %s23, 1
      %p151 = por %p149, %p150
      %p152 = scmp.ne.s32.totalorder %s141, %s142
      %p153 = scmp.eq.s32.totalorder %s23, 0
      %p154 = por %p152, %p153
      %p155 = scmp.ne.s32.totalorder %s141, %s142
      %p156 = scmp.eq.s32.totalorder %s24, 1
      %p157 = por %p155, %p156
      %p159 = scmp.ne.s32.totalorder %s142, %s158
      %p160 = scmp.eq.s32.totalorder %s24, 0
      %p161 = por %p159, %p160
      %p162 = scmp.le.s32.totalorder 1, %s18
      %p163 = scmp.lt.s32.totalorder %s18, 3
      %p164 = pnand %p162, %p163
      %p165 = pneg %p164
      // Predicated region
      $region9: #{tpu_custom_call.1} parent=5 // pred_check
        _
      $region10: #{tpu_custom_call.1} parent=5 // pred_check_branch
        %167 = sbr.rel (%p164) target = $region12
      $region11: #{tpu_custom_call.1} parent=5 // pred_region
        %s168 = ssub.s32 %s18, 1
        // Predicated region
        $region13: #{tpu_custom_call.1} parent=11 // pred_check
          %p169 = pneg %p65
        $region14: #{tpu_custom_call.1} parent=11 // pred_check_branch
          %171 = sbr.rel (%p169) target = $region16
        $region15: #{tpu_custom_call.1} parent=11 // pred_region
          _
        $region16: #{tpu_custom_call.1} parent=11 // pred_fallthru
          _
        // Predicated region
        $region17: #{tpu_custom_call.1} parent=11 // pred_check
          %p172 = pneg %p86
        $region18: #{tpu_custom_call.1} parent=11 // pred_check_branch
          %174 = sbr.rel (%p172) target = $region20
        $region19: #{tpu_custom_call.1} parent=11 // pred_region
          _
        $region20: #{tpu_custom_call.1} parent=11 // pred_fallthru
          _
        // Predicated region
        $region21: #{tpu_custom_call.1} parent=11 // pred_check
          %p175 = pneg %p107
        $region22: #{tpu_custom_call.1} parent=11 // pred_check_branch
          %177 = sbr.rel (%p175) target = $region24
        $region23: #{tpu_custom_call.1} parent=11 // pred_region
          %s179 = ssub.s32 2048, 2048
          %180 = vsyncadd [#allocation6], %s179
          %s181 = sshll.u32 [#allocation5], 4
          %s182 = int_to_ptr.vmem [resolvable:$true] %s181
          %187 = dma.hbm_to_vmem [thread:$0]  %s3, 2048, %s182, [#allocation6], 128, 128, 8
        $region24: #{tpu_custom_call.1} parent=11 // pred_fallthru
          _
        // Predicated region
        $region25: #{tpu_custom_call.1} parent=11 // pred_check
          %p188 = pneg %p128
        $region26: #{tpu_custom_call.1} parent=11 // pred_check_branch
          %190 = sbr.rel (%p188) target = $region28
        $region27: #{tpu_custom_call.1} parent=11 // pred_region
          _
        $region28: #{tpu_custom_call.1} parent=11 // pred_fallthru
          _
      $region12: #{tpu_custom_call.1} parent=5 // pred_fallthru
        _
      %p191 = scmp.lt.s32.totalorder %s18, 2
      // Predicated region
      $region29: #{tpu_custom_call.1} parent=5 // pred_check
        %p192 = pneg %p191
      $region30: #{tpu_custom_call.1} parent=5 // pred_check_branch
        %194 = sbr.rel (%p192) target = $region32
      $region31: #{tpu_custom_call.1} parent=5 // pred_region
        // Predicated region
        $region33: #{tpu_custom_call.1} parent=31 // pred_check
          %p195 = pneg %p38
        $region34: #{tpu_custom_call.1} parent=31 // pred_check_branch
          %197 = sbr.rel (%p195) target = $region36
        $region35: #{tpu_custom_call.1} parent=31 // pred_region
          %s198 = sand.u32 %s28, 1
          %s199 = scalar_lea.sflag [#allocation3], %s198
          %s200 = sand.u32 %s28, 1
          %s201 = smul.addr %s200, 8
          %s202 = scalar_lea.vmem [#allocation2], %s201
          %s204 = ssub.s32 128, 128
          %205 = vsyncadd %s199, %s204
          %s206 = smul.addr %s18, 128
          %s207 = scalar_lea.hbm %s0, %s206
          %s209 = sshll.u32 %s202, 4
          %s210 = int_to_ptr.vmem [resolvable:$true] %s209
          %212 = dma.hbm_to_vmem [thread:$0]  %s207, 128, %s210, %s199
        $region36: #{tpu_custom_call.1} parent=31 // pred_fallthru
          _
      $region32: #{tpu_custom_call.1} parent=5 // pred_fallthru
        _
      %p213 = scmp.le.s32.totalorder 1, %s18
      %p214 = scmp.lt.s32.totalorder %s18, 3
      %p215 = pnand %p213, %p214
      %p216 = pneg %p215
      // Predicated region
      $region37: #{tpu_custom_call.1} parent=5 // pred_check
        _
      $region38: #{tpu_custom_call.1} parent=5 // pred_check_branch
        %218 = sbr.rel (%p215) target = $region40
      $region39: #{tpu_custom_call.1} parent=5 // pred_region
        %s219 = ssub.s32 %s18, 1
        %s220 = sand.u32 %s31, 1
        %s221 = scalar_lea.sflag [#allocation3], %s220
        %s222 = sand.u32 %s31, 1
        %s223 = smul.addr %s222, 8
        %s224 = scalar_lea.vmem [#allocation2], %s223
        // Predicated region
        $region41: #{tpu_custom_call.1} parent=39 // pred_check
          %p225 = pneg %p44
        $region42: #{tpu_custom_call.1} parent=39 // pred_check_branch
          %227 = sbr.rel (%p225) target = $region44
        $region43: #{tpu_custom_call.1} parent=39 // pred_region
          %228 = dma.done %s221, 128
        $region44: #{tpu_custom_call.1} parent=39 // pred_fallthru
          _
        // Predicated region
        $region45: #{tpu_custom_call.1} parent=39 // pred_check
          %p229 = pneg %p107
        $region46: #{tpu_custom_call.1} parent=39 // pred_check_branch
          %231 = sbr.rel (%p229) target = $region48
        $region47: #{tpu_custom_call.1} parent=39 // pred_region
          %232 = dma.done [#allocation6], 2048
        $region48: #{tpu_custom_call.1} parent=39 // pred_fallthru
          _
        %s233 = sand.u32 %s31, 1
        %s234 = scalar_lea.sflag [#allocation3], %s233
        %s235 = sand.u32 %s31, 1
        %s236 = smul.addr %s235, 8
        %s237 = scalar_lea.vmem [#allocation2], %s236
        %p238 = pneg %p44
        %p239 = pneg %p41
        %p240 = pneg %p65
        %p241 = pneg %p62
        %p242 = pneg %p86
        %p243 = pneg %p83
        %p244 = pneg %p107
        %p245 = pneg %p104
        %p246 = pneg %p128
        %p247 = pneg %p125
        %p248 = pneg %p154
        %p249 = pneg %p151
        %s250 = sand.u32 %s141, 1
        %s251 = scalar_lea.sflag [#allocation4], %s250
        %s252 = sand.u32 %s141, 1
        %s253 = smul.addr %s252, 8
        %s254 = scalar_lea.vmem [#allocation7], %s253
        %v255 = vld [vmem:[%s224] sm:$0xff]
        %256 = vadd.xlane.f32.xlu0 %v255
        %v257 = vpop.xlane.xlu0 %256
        %v258 = vrcp.pop 128.0
        %v259 = vmul.f32 %v257, %v258
        %v260 = vsub.f32 %v255, %v259
        %v261 = vmul.f32 %v260, %v260
        %262 = vadd.xlane.f32.xlu0 %v261
        %v263 = vpop.xlane.xlu0 %262
        %v264 = vmul.f32 %v263, %v258
        %v265 = vadd.f32 %v264, 1e-06
        %v266 = vrsqrt.pop %v265
        %v267 = vmul.f32 %v260, %v266
        %v268 = vld [vmem:[%s1] sm:$0x1]
        %v270 = vlaneseq
        %v271 = vshrl.u32 %v270, 7
        %v272 = vsub.s32 0, %v271
        %v273 = vrot.slane %v268, %v272
        %v275 = vmul.f32 %v267, %v273
        %v276 = vld [vmem:[%s2] sm:$0x1]
        %v278 = vlaneseq
        %v279 = vshrl.u32 %v278, 7
        %v280 = vsub.s32 0, %v279
        %v281 = vrot.slane %v276, %v280
        %v283 = vadd.f32 %v275, %v281
        %v284 = vld [vmem:[#allocation5] sm:$0xff]
        %v285 = vld [vmem:[#allocation5 + $0x8] sm:$0xff]
        %v286 = vld [vmem:[#allocation5 + $0x10] sm:$0xff]
        %v287 = vld [vmem:[#allocation5 + $0x18] sm:$0xff]
        %v288 = vld [vmem:[#allocation5 + $0x20] sm:$0xff]
        %v289 = vld [vmem:[#allocation5 + $0x28] sm:$0xff]
        %v290 = vld [vmem:[#allocation5 + $0x30] sm:$0xff]
        %v291 = vld [vmem:[#allocation5 + $0x38] sm:$0xff]
        %v292 = vld [vmem:[#allocation5 + $0x40] sm:$0xff]
        %v293 = vld [vmem:[#allocation5 + $0x48] sm:$0xff]
        %v294 = vld [vmem:[#allocation5 + $0x50] sm:$0xff]
        %v295 = vld [vmem:[#allocation5 + $0x58] sm:$0xff]
        %v296 = vld [vmem:[#allocation5 + $0x60] sm:$0xff]
        %v297 = vld [vmem:[#allocation5 + $0x68] sm:$0xff]
        %v298 = vld [vmem:[#allocation5 + $0x70] sm:$0xff]
        %v299 = vld [vmem:[#allocation5 + $0x78] sm:$0xff]
        %v300 = vld [vmem:[%s4] sm:$0x1]
        %v302 = vlaneseq
        %v303 = vshrl.u32 %v302, 7
        %v304 = vsub.s32 0, %v303
        %v305 = vrot.slane %v300, %v304
        %307 = vmatprep.subr.mxu0 0.0
        %308 = vmatpush1.msra.mxu0 %v284
        %309 = vmatprep.subr.mxu0 0.0
        %310 = vmatpush1.msra.mxu0 %v285
        %311 = vmatprep.subr.mxu0 0.0
        %312 = vmatpush1.msra.mxu0 %v286
        %313 = vmatprep.subr.mxu0 0.0
        %314 = vmatpush1.msra.mxu0 %v287
        %315 = vmatprep.subr.mxu0 0.0
        %316 = vmatpush1.msra.mxu0 %v288
        %317 = vmatprep.subr.mxu0 0.0
        %318 = vmatpush1.msra.mxu0 %v289
        %319 = vmatprep.subr.mxu0 0.0
        %320 = vmatpush1.msra.mxu0 %v290
        %321 = vmatprep.subr.mxu0 0.0
        %322 = vmatpush1.msra.mxu0 %v291
        %323 = vmatprep.subr.mxu0 0.0
        %324 = vmatpush1.msra.mxu0 %v292
        %325 = vmatprep.subr.mxu0 0.0
        %326 = vmatpush1.msra.mxu0 %v293
        %327 = vmatprep.subr.mxu0 0.0
        %328 = vmatpush1.msra.mxu0 %v294
        %329 = vmatprep.subr.mxu0 0.0
        %330 = vmatpush1.msra.mxu0 %v295
        %331 = vmatprep.subr.mxu0 0.0
        %332 = vmatpush1.msra.mxu0 %v296
        %333 = vmatprep.subr.mxu0 0.0
        %334 = vmatpush1.msra.mxu0 %v297
        %335 = vmatprep.subr.mxu0 0.0
        %336 = vmatpush1.msra.mxu0 %v298
        %337 = vmatprep.subr.mxu0 0.0
        %338 = vmatpush1.msra.mxu0 %v299
        %339 = vmatprep.subr.mxu0 0.0
        %340 = vmatpush1.msra.mxu0 0.0
        %341 = vmatprep.subr.mxu0 0.0
        %342 = vmatpush1.msra.mxu0 0.0
        %343 = vmatprep.subr.mxu0 0.0
        %344 = vmatpush1.msra.mxu0 0.0
        %345 = vmatprep.subr.mxu0 0.0
        %346 = vmatpush1.msra.mxu0 0.0
        %347 = vmatprep.subr.mxu0 0.0
        %348 = vmatpush1.msra.mxu0 0.0
        %349 = vmatprep.subr.mxu0 0.0
        %350 = vmatpush1.msra.mxu0 0.0
        %351 = vmatprep.subr.mxu0 0.0
        %352 = vmatpush1.msra.mxu0 0.0
        %353 = vmatprep.subr.mxu0 0.0
        %354 = vmatpush1.msra.mxu0 0.0
        %355 = vmatprep.subr.mxu0 0.0
        %356 = vmatpush1.msra.mxu0 0.0
        %357 = vmatprep.subr.mxu0 0.0
        %358 = vmatpush1.msra.mxu0 0.0
        %359 = vmatprep.subr.mxu0 0.0
        %360 = vmatpush1.msra.mxu0 0.0
        %361 = vmatprep.subr.mxu0 0.0
        %362 = vmatpush1.msra.mxu0 0.0
        %363 = vmatprep.subr.mxu0 0.0
        %364 = vmatpush1.msra.mxu0 0.0
        %365 = vmatprep.subr.mxu0 0.0
        %366 = vmatpush1.msra.mxu0 0.0
        %367 = vmatprep.subr.mxu0 0.0
        %368 = vmatpush1.msra.mxu0 0.0
        %369 = vmatprep.subr.mxu0 0.0
        %370 = vmatpush1.msra.mxu0 0.0
        %371 = vmatprep.mubr.f32.mxu0 0.0
        %372 = vmatmul.mubr.f32.gmra.mrb[0].mxu0 %v283
        %v373 = vpop.f32.mrb[0].mxu0
        %v374 = vadd.f32 %v305, %v373
        %v375 = vpop.f32.mrb[0].mxu0
        %376 = vdwg.mxu0
        %v377 = vadd.f32 %v255, %v374
        %378 = vst [vmem:[%s254] sm:$0xff] %v377
        %s379 = sand.u32 %s141, 1
        %s380 = scalar_lea.sflag [#allocation4], %s379
        %s381 = sand.u32 %s141, 1
        %s382 = smul.addr %s381, 8
        %s383 = scalar_lea.vmem [#allocation7], %s382
        // Predicated region
        $region49: #{tpu_custom_call.1} parent=39 // pred_check
          %p384 = pneg %p151
        $region50: #{tpu_custom_call.1} parent=39 // pred_check_branch
          %386 = sbr.rel (%p384) target = $region52
        $region51: #{tpu_custom_call.1} parent=39 // pred_region
          %s388 = ssub.s32 128, 128
          %389 = vsyncadd %s380, %s388
          %s390 = smul.addr %s23, 128
          %s391 = scalar_lea.hbm %s5, %s390
          %s393 = sshll.u32 %s383, 4
          %s394 = int_to_ptr.vmem [resolvable:$true] %s393
          %396 = dma.vmem_to_hbm [thread:$0]  %s394, 128, %s391, %s380
        $region52: #{tpu_custom_call.1} parent=39 // pred_fallthru
          _
      $region40: #{tpu_custom_call.1} parent=5 // pred_fallthru
        _
      %p397 = scmp.le.s32.totalorder 2, %s18
      // Predicated region
      $region53: #{tpu_custom_call.1} parent=5 // pred_check
        %p398 = pneg %p397
      $region54: #{tpu_custom_call.1} parent=5 // pred_check_branch
        %400 = sbr.rel (%p398) target = $region56
      $region55: #{tpu_custom_call.1} parent=5 // pred_region
        %s401 = ssub.s32 %s18, 2
        // Predicated region
        $region57: #{tpu_custom_call.1} parent=55 // pred_check
          %p402 = pneg %p157
        $region58: #{tpu_custom_call.1} parent=55 // pred_check_branch
          %404 = sbr.rel (%p402) target = $region60
        $region59: #{tpu_custom_call.1} parent=55 // pred_region
          %s405 = sand.u32 %s142, 1
          %s406 = scalar_lea.sflag [#allocation4], %s405
          %s407 = sand.u32 %s142, 1
          %s408 = smul.addr %s407, 8
          %s409 = scalar_lea.vmem [#allocation7], %s408
          %410 = dma.done %s406, 128
        $region60: #{tpu_custom_call.1} parent=55 // pred_fallthru
          _
      $region56: #{tpu_custom_call.1} parent=5 // pred_fallthru
        _
    $region6: #{tpu_custom_call.1} parent=1 // loop_footer
      %s22 = sadd.s32 1, %s18
    $region7: #{tpu_custom_call.1} parent=1 // loop_footer_branch
      %17 = sbr.rel target = $region3
    $region8: #{tpu_custom_call.1} parent=1 // loop_exit
      _
    %411 = vsyncpa [#allocation3], 1
    %s412 = scalar_lea.sflag [#allocation3], 1
    %413 = vsyncpa %s412, 1
    %414 = vsyncpa [#allocation6], 1
    %415 = vsyncpa [#allocation4], 1
    %s416 = scalar_lea.sflag [#allocation4], 1
    %417 = vsyncpa %s416, 1

</llo_original>
